<compile_context>
chip_gen: v6e
topology: v6e:2x2x1
jax: 0.10.0
libtpu: 0.0.40
codegen_flags: <defaults>
</compile_context>

<pallas_src>
import jax
import jax.numpy as jnp
from jax.experimental import pallas as pl
from jax.experimental.pallas import tpu as pltpu

LANE = 128  # TPU lane width; layer-2 output is padded to this for lane-dense stores


def _mlp_kernel(x_ref, w1t_ref, w2tp_ref, o_ref):
    # x_ref:    [tb, S]
    # w1t_ref:  [S, H]
    # w2tp_ref: [H, LANE]  (layer2 weight transposed, zero-padded on the out dim)
    # o_ref:    [tb, LANE] (only the first ndim columns are meaningful)
    h = jnp.dot(x_ref[...], w1t_ref[...], preferred_element_type=jnp.float32)
    h = jnp.maximum(h, 0.0)  # ReLU
    o_ref[...] = jnp.dot(
        h, w2tp_ref[...], preferred_element_type=jnp.float32
    ).astype(o_ref.dtype)


def make_svdd_forward(w1, w2, *, tile_b=256):
    """Prepare weights once, return a jitted forward matching the PyTorch module.

    w1: [H, S]  (layer1.weight, PyTorch convention)
    w2: [D, H]  (layer2.weight, PyTorch convention)
    Returned fn: x [B, S] -> [B, D]
    """
    H, S = w1.shape
    D = w2.shape[0]
    assert tile_b % 8 == 0
    assert D <= LANE

    # One-time weight preparation (NOT in the per-call hot path):
    #  - transpose to matmul-friendly layout
    #  - pad layer2's output dim to a full 128-lane tile (zero columns -> no
    #    effect on the valid outputs, unmasked stores in the kernel).
    w1t = jnp.asarray(w1, jnp.float32).T                               # [S, H]
    w2tp = jnp.zeros((H, LANE), jnp.float32).at[:, :D].set(
        jnp.asarray(w2, jnp.float32).T)                                # [H, LANE]

    def _cost(B):
        return pl.CostEstimate(
            flops=2 * B * (S * H + H * LANE),
            transcendentals=0,
            bytes_accessed=4 * (B * S + S * H + H * LANE + B * LANE),
        )

    def _call_small(x):
        # Grid-free: single invocation, whole arrays resident in VMEM.
        B = x.shape[0]
        return pl.pallas_call(
            _mlp_kernel,
            out_shape=jax.ShapeDtypeStruct((B, LANE), jnp.float32),
            in_specs=[
                pl.BlockSpec(memory_space=pltpu.MemorySpace.VMEM),
                pl.BlockSpec(memory_space=pltpu.MemorySpace.VMEM),
                pl.BlockSpec(memory_space=pltpu.MemorySpace.VMEM),
            ],
            out_specs=pl.BlockSpec(memory_space=pltpu.MemorySpace.VMEM),
            cost_estimate=_cost(B),
        )(x, w1t, w2tp)

    def _call_tiled(x):
        # Batch-tiled grid over B; weights are a single resident block.
        B = x.shape[0]
        nb = pl.cdiv(B, tile_b)
        return pl.pallas_call(
            _mlp_kernel,
            out_shape=jax.ShapeDtypeStruct((B, LANE), jnp.float32),
            grid=(nb,),
            in_specs=[
                pl.BlockSpec((tile_b, S), lambda i: (i, 0)),
                pl.BlockSpec((S, H), lambda i: (0, 0)),
                pl.BlockSpec((H, LANE), lambda i: (0, 0)),
            ],
            out_specs=pl.BlockSpec((tile_b, LANE), lambda i: (i, 0)),
            compiler_params=pltpu.CompilerParams(
                dimension_semantics=("parallel",),  # v7x: shard rows across both TCs
            ),
            cost_estimate=_cost(B),
        )(x, w1t, w2tp)

    @jax.jit
    def forward(x):
        x = jnp.asarray(x, jnp.float32)
        B = x.shape[0]
        if B <= tile_b:
            # Pad batch to a sublane multiple (8) so stores are unmasked; the
            # pad/slice is fused by XLA around the custom call.
            Bp = ((B + 7) // 8) * 8
            xp = x if Bp == B else jnp.pad(x, ((0, Bp - B), (0, 0)))
            out = _call_small(xp)[:B]
        else:
            out = _call_tiled(x)
        return out[:, :D]  # drop lane padding (fused by XLA under jit)

    return forward


if __name__ == "__main__":
    # Module defaults: ndim=2, state_size=5, hidden=128 (fixed by the module).
    ndim = 2
    state_size = 5
    hidden = 128

    key = jax.random.PRNGKey(0)
    kx_small, kx_big, kw1, kw2 = jax.random.split(key, 4)

    # Deterministic synthetic parameters (PyTorch Linear weight shapes).
    w1 = jax.random.normal(kw1, (hidden, state_size), dtype=jnp.float32) * 0.1
    w2 = jax.random.normal(kw2, (ndim, hidden), dtype=jnp.float32) * 0.1

    forward = make_svdd_forward(w1, w2, tile_b=256)

    def ref(x):
        return jnp.maximum(x @ w1.T, 0.0) @ w2.T

    # Small batch -> grid-free path.
    x_small = jax.random.normal(kx_small, (8, state_size), dtype=jnp.float32)
    out_small = jax.block_until_ready(forward(x_small))
    assert out_small.shape == (8, ndim)
    assert jnp.allclose(out_small, ref(x_small), atol=1e-5, rtol=1e-5)

    # Larger batch -> batch-tiled "parallel" grid path.
    x_big = jax.random.normal(kx_big, (512, state_size), dtype=jnp.float32)
    out_big = jax.block_until_ready(forward(x_big))
    assert out_big.shape == (512, ndim)
    assert jnp.allclose(out_big, ref(x_big), atol=1e-4, rtol=1e-4)

    print("KERNEL_OK")
</pallas_src>

<mosaic_0001>
module attributes {stable_mosaic.version = 11 : i64} {
  func.func @_mlp_kernel(%arg0: memref<8x5xf32, #tpu.memory_space<vmem>>, %arg1: memref<5x128xf32, #tpu.memory_space<vmem>>, %arg2: memref<128x128xf32, #tpu.memory_space<vmem>>, %arg3: memref<8x128xf32, #tpu.memory_space<vmem>>) attributes {dimension_semantics = [], scalar_prefetch = 0 : i64, scratch_operands = 0 : i64, tpu.core_type = #tpu.core_type<tc>} {
    %c0 = arith.constant 0 : index
    %c0_0 = arith.constant 0 : index
    %0 = vector.load %arg0[%c0, %c0_0] : memref<8x5xf32, #tpu.memory_space<vmem>>, vector<8x5xf32>
    %c0_1 = arith.constant 0 : index
    %c0_2 = arith.constant 0 : index
    %1 = vector.load %arg1[%c0_1, %c0_2] : memref<5x128xf32, #tpu.memory_space<vmem>>, vector<5x128xf32>
    %cst = arith.constant dense<0.000000e+00> : vector<8x128xf32>
    %2 = tpu.matmul %0, %1, %cst {dimension_numbers = #tpu.dot_dimension_numbers<[1], [0], [0], [1], [0, 0, 1, 1], [], []>} : vector<8x5xf32>, vector<5x128xf32>, vector<8x128xf32> -> vector<8x128xf32>
    %cst_3 = arith.constant 0.000000e+00 : f32
    %3 = vector.broadcast %cst_3 : f32 to vector<8x128xf32>
    %4 = arith.maximumf %2, %3 : vector<8x128xf32>
    %c0_4 = arith.constant 0 : index
    %c0_5 = arith.constant 0 : index
    %5 = vector.load %arg2[%c0_4, %c0_5] : memref<128x128xf32, #tpu.memory_space<vmem>>, vector<128x128xf32>
    %cst_6 = arith.constant dense<0.000000e+00> : vector<8x128xf32>
    %6 = tpu.matmul %4, %5, %cst_6 {dimension_numbers = #tpu.dot_dimension_numbers<[1], [0], [0], [1], [0, 0, 1, 1], [], []>} : vector<8x128xf32>, vector<128x128xf32>, vector<8x128xf32> -> vector<8x128xf32>
    %c0_7 = arith.constant 0 : index
    %c0_8 = arith.constant 0 : index
    %7 = vector.load %arg3[%c0_7, %c0_8] : memref<8x128xf32, #tpu.memory_space<vmem>>, vector<8x128xf32>
    tpu.vector_store %arg3[%c0_7, %c0_8], %6 {strides = array<i32>} : memref<8x128xf32, #tpu.memory_space<vmem>>, vector<8x128xf32>,
    return
  }
}

</mosaic_0001>

<llo_original>
// kernel: forward.1
$region0: #{forward.1}
  #allocation0 [shape = 'u32[]', space=smem, size = 0x4, offset = 0x4, fixed_abs, tag = 'smem constant byte address 0x4 - core index']
  #allocation1 [shape = 'u32[144,128]{1,0:T(1,128)}', space=vmem, size = 0x12000, scoped, tag = 'internal scratch']
  %s0 = inlined_call_operand.hbm [shape: f32[8,5], index: 0, kind: input, shape index: {}]
  %s1 = inlined_call_operand.hbm [shape: f32[5,128], index: 1, kind: input, shape index: {}]
  %s2 = inlined_call_operand.hbm [shape: f32[128,128], index: 2, kind: input, shape index: {}]
  %s3 = inlined_call_operand.vmem [shape: f32[8,128], index: 3, kind: output, shape index: {}]
  %s4 = sld [smem:[#allocation0]]
  $region34: #{forward.1} parent=0
    _
  %s6 = ssub.s32 1, %s4
  %s7 = scalar_select 0, %s6, %s4
  $region1: #{forward.1} parent=0
    #allocation2 [shape = 'u8[4096]{0}', space=vmem, size = 0x1000, scoped, tag = 'input window, operand 0, single buffered']
    #allocation3 [shape = 's32[1]{0}', space=sflag, size = 0x4, scoped, tag = 'scoped memory for forward.1']
    #allocation4 [shape = 'u8[4096]{0}', space=vmem, size = 0x1000, scoped, tag = 'input window, operand 1, single buffered']
    #allocation5 [shape = 's32[1]{0}', space=sflag, size = 0x4, scoped, tag = 'scoped memory for forward.1']
    #allocation6 [shape = 'u8[65536]{0}', space=vmem, size = 0x10000, scoped, tag = 'input window, operand 2, single buffered']
    %8 = vsyncpa [#allocation3], 0
    %9 = vsyncpa [#allocation5], 0
    // Predicated region
    $region2: #{forward.1} parent=1 // pred_check
      _
    $region3: #{forward.1} parent=1 // pred_check_branch
      %11 = sbr.rel (0) target = $region5
    $region4: #{forward.1} parent=1 // pred_region
      %s13 = ssub.s32 128, 128
      %14 = vsyncadd [#allocation3], %s13
      %s16 = sshll.u32 [#allocation2], 4
      %s17 = int_to_ptr.vmem [resolvable:$true] %s16
      %19 = dma.hbm_to_vmem [thread:$0]  %s0, 128, %s17, [#allocation3]
    $region5: #{forward.1} parent=1 // pred_fallthru
      _
    // Predicated region
    $region6: #{forward.1} parent=1 // pred_check
      _
    $region7: #{forward.1} parent=1 // pred_check_branch
      %21 = sbr.rel (0) target = $region9
    $region8: #{forward.1} parent=1 // pred_region
      %s23 = ssub.s32 128, 128
      %24 = vsyncadd [#allocation5], %s23
      %s26 = sshll.u32 [#allocation4], 4
      %s27 = int_to_ptr.vmem [resolvable:$true] %s26
      %29 = dma.hbm_to_vmem [thread:$0]  %s1, 128, %s27, [#allocation5]
    $region9: #{forward.1} parent=1 // pred_fallthru
      _
    // Predicated region
    $region10: #{forward.1} parent=1 // pred_check
      _
    $region11: #{forward.1} parent=1 // pred_check_branch
      %31 = sbr.rel (0) target = $region13
    $region12: #{forward.1} parent=1 // pred_region
      %s33 = ssub.s32 2048, 2048
      %34 = vsyncadd [#allocation5], %s33
      %s35 = sshll.u32 [#allocation6], 4
      %s36 = int_to_ptr.vmem [resolvable:$true] %s35
      %41 = dma.hbm_to_vmem [thread:$0]  %s2, 2048, %s36, [#allocation5], 128, 128, 8
    $region13: #{forward.1} parent=1 // pred_fallthru
      _
    // Predicated region
    $region14: #{forward.1} parent=1 // pred_check
      _
    $region15: #{forward.1} parent=1 // pred_check_branch
      %43 = sbr.rel (0) target = $region17
    $region16: #{forward.1} parent=1 // pred_region
      %44 = dma.done [#allocation3], 128
    $region17: #{forward.1} parent=1 // pred_fallthru
      _
    // Predicated region
    $region18: #{forward.1} parent=1 // pred_check
      _
    $region19: #{forward.1} parent=1 // pred_check_branch
      %46 = sbr.rel (0) target = $region21
    $region20: #{forward.1} parent=1 // pred_region
      %47 = dma.done [#allocation5], 128
    $region21: #{forward.1} parent=1 // pred_fallthru
      _
    // Predicated region
    $region22: #{forward.1} parent=1 // pred_check
      _
    $region23: #{forward.1} parent=1 // pred_check_branch
      %49 = sbr.rel (0) target = $region25
    $region24: #{forward.1} parent=1 // pred_region
      %50 = dma.done [#allocation5], 2048
    $region25: #{forward.1} parent=1 // pred_fallthru
      _
    %v51 = vld [vmem:[#allocation2] sm:$0xff]
    %v52 = vld [vmem:[#allocation4] sm:$0x1f]
    %vm53 = vcmask 39936
    %v55 = vsel %vm53, %v51, 0
    %vm57 = vcmask 1044480
    %v59 = vsel %vm57, %v52, 0
    %61 = vmatprep.subr.mxu0 0.0
    %62 = vmatpush1.msra.mxu0 0.0
    %63 = vmatprep.subr.mxu0 0.0
    %64 = vmatpush1.msra.mxu0 0.0
    %65 = vmatprep.subr.mxu0 0.0
    %66 = vmatpush1.msra.mxu0 0.0
    %67 = vmatprep.subr.mxu0 0.0
    %68 = vmatpush1.msra.mxu0 0.0
    %69 = vmatprep.subr.mxu0 0.0
    %70 = vmatpush1.msra.mxu0 0.0
    %71 = vmatprep.subr.mxu0 0.0
    %72 = vmatpush1.msra.mxu0 0.0
    %73 = vmatprep.subr.mxu0 0.0
    %74 = vmatpush1.msra.mxu0 0.0
    %75 = vmatprep.subr.mxu0 0.0
    %76 = vmatpush1.msra.mxu0 0.0
    %77 = vmatprep.subr.mxu0 0.0
    %78 = vmatpush1.msra.mxu0 0.0
    %79 = vmatprep.subr.mxu0 0.0
    %80 = vmatpush1.msra.mxu0 0.0
    %81 = vmatprep.subr.mxu0 0.0
    %82 = vmatpush1.msra.mxu0 0.0
    %83 = vmatprep.subr.mxu0 0.0
    %84 = vmatpush1.msra.mxu0 0.0
    %85 = vmatprep.subr.mxu0 0.0
    %86 = vmatpush1.msra.mxu0 0.0
    %87 = vmatprep.subr.mxu0 0.0
    %88 = vmatpush1.msra.mxu0 0.0
    %89 = vmatprep.subr.mxu0 0.0
    %90 = vmatpush1.msra.mxu0 0.0
    %91 = vmatprep.subr.mxu0 0.0
    %92 = vmatpush1.msra.mxu0 %v59
    %93 = vmatprep.subr.mxu0 0.0
    %94 = vmatpush2.msra.mxu0 0.0
    %95 = vmatprep.subr.mxu0 0.0
    %96 = vmatpush2.msra.mxu0 0.0
    %97 = vmatprep.subr.mxu0 0.0
    %98 = vmatpush2.msra.mxu0 0.0
    %99 = vmatprep.subr.mxu0 0.0
    %100 = vmatpush2.msra.mxu0 0.0
    %101 = vmatprep.subr.mxu0 0.0
    %102 = vmatpush2.msra.mxu0 0.0
    %103 = vmatprep.subr.mxu0 0.0
    %104 = vmatpush2.msra.mxu0 0.0
    %105 = vmatprep.subr.mxu0 0.0
    %106 = vmatpush2.msra.mxu0 0.0
    %107 = vmatprep.subr.mxu0 0.0
    %108 = vmatpush2.msra.mxu0 0.0
    %109 = vmatprep.subr.mxu0 0.0
    %110 = vmatpush2.msra.mxu0 0.0
    %111 = vmatprep.subr.mxu0 0.0
    %112 = vmatpush2.msra.mxu0 0.0
    %113 = vmatprep.subr.mxu0 0.0
    %114 = vmatpush2.msra.mxu0 0.0
    %115 = vmatprep.subr.mxu0 0.0
    %116 = vmatpush2.msra.mxu0 0.0
    %117 = vmatprep.subr.mxu0 0.0
    %118 = vmatpush2.msra.mxu0 0.0
    %119 = vmatprep.subr.mxu0 0.0
    %120 = vmatpush2.msra.mxu0 0.0
    %121 = vmatprep.subr.mxu0 0.0
    %122 = vmatpush2.msra.mxu0 0.0
    %123 = vmatprep.subr.mxu0 0.0
    %124 = vmatpush2.msra.mxu0 0.0
    %125 = vmatprep.mubr.f32.mxu0 0.0
    %126 = vmatmul.mubr.f32.gmra.mxu0 %v55
    %v127 = vpop.f32.mrf.mxu0
    %v128 = vadd.f32 0.0, %v127
    %v129 = vpop.f32.mrf.mxu0
    %130 = vdwg.mxu0
    %v131 = vmax.f32 %v128, 0.0
    %v132 = vld [vmem:[#allocation6] sm:$0xff]
    %v133 = vld [vmem:[#allocation6 + $0x8] sm:$0xff]
    %v134 = vld [vmem:[#allocation6 + $0x10] sm:$0xff]
    %v135 = vld [vmem:[#allocation6 + $0x18] sm:$0xff]
    %v136 = vld [vmem:[#allocation6 + $0x20] sm:$0xff]
    %v137 = vld [vmem:[#allocation6 + $0x28] sm:$0xff]
    %v138 = vld [vmem:[#allocation6 + $0x30] sm:$0xff]
    %v139 = vld [vmem:[#allocation6 + $0x38] sm:$0xff]
    %v140 = vld [vmem:[#allocation6 + $0x40] sm:$0xff]
    %v141 = vld [vmem:[#allocation6 + $0x48] sm:$0xff]
    %v142 = vld [vmem:[#allocation6 + $0x50] sm:$0xff]
    %v143 = vld [vmem:[#allocation6 + $0x58] sm:$0xff]
    %v144 = vld [vmem:[#allocation6 + $0x60] sm:$0xff]
    %v145 = vld [vmem:[#allocation6 + $0x68] sm:$0xff]
    %v146 = vld [vmem:[#allocation6 + $0x70] sm:$0xff]
    %v147 = vld [vmem:[#allocation6 + $0x78] sm:$0xff]
    %148 = vmatprep.subr.mxu0 0.0
    %149 = vmatpush1.msra.mxu0 %v147
    %150 = vmatprep.subr.mxu0 0.0
    %151 = vmatpush1.msra.mxu0 %v146
    %152 = vmatprep.subr.mxu0 0.0
    %153 = vmatpush1.msra.mxu0 %v145
    %154 = vmatprep.subr.mxu0 0.0
    %155 = vmatpush1.msra.mxu0 %v144
    %156 = vmatprep.subr.mxu0 0.0
    %157 = vmatpush1.msra.mxu0 %v143
    %158 = vmatprep.subr.mxu0 0.0
    %159 = vmatpush1.msra.mxu0 %v142
    %160 = vmatprep.subr.mxu0 0.0
    %161 = vmatpush1.msra.mxu0 %v141
    %162 = vmatprep.subr.mxu0 0.0
    %163 = vmatpush1.msra.mxu0 %v140
    %164 = vmatprep.subr.mxu0 0.0
    %165 = vmatpush1.msra.mxu0 %v139
    %166 = vmatprep.subr.mxu0 0.0
    %167 = vmatpush1.msra.mxu0 %v138
    %168 = vmatprep.subr.mxu0 0.0
    %169 = vmatpush1.msra.mxu0 %v137
    %170 = vmatprep.subr.mxu0 0.0
    %171 = vmatpush1.msra.mxu0 %v136
    %172 = vmatprep.subr.mxu0 0.0
    %173 = vmatpush1.msra.mxu0 %v135
    %174 = vmatprep.subr.mxu0 0.0
    %175 = vmatpush1.msra.mxu0 %v134
    %176 = vmatprep.subr.mxu0 0.0
    %177 = vmatpush1.msra.mxu0 %v133
    %178 = vmatprep.subr.mxu0 0.0
    %179 = vmatpush1.msra.mxu0 %v132
    %180 = vmatprep.subr.mxu0 0.0
    %181 = vmatpush2.msra.mxu0 0.0
    %182 = vmatprep.subr.mxu0 0.0
    %183 = vmatpush2.msra.mxu0 0.0
    %184 = vmatprep.subr.mxu0 0.0
    %185 = vmatpush2.msra.mxu0 0.0
    %186 = vmatprep.subr.mxu0 0.0
    %187 = vmatpush2.msra.mxu0 0.0
    %188 = vmatprep.subr.mxu0 0.0
    %189 = vmatpush2.msra.mxu0 0.0
    %190 = vmatprep.subr.mxu0 0.0
    %191 = vmatpush2.msra.mxu0 0.0
    %192 = vmatprep.subr.mxu0 0.0
    %193 = vmatpush2.msra.mxu0 0.0
    %194 = vmatprep.subr.mxu0 0.0
    %195 = vmatpush2.msra.mxu0 0.0
    %196 = vmatprep.subr.mxu0 0.0
    %197 = vmatpush2.msra.mxu0 0.0
    %198 = vmatprep.subr.mxu0 0.0
    %199 = vmatpush2.msra.mxu0 0.0
    %200 = vmatprep.subr.mxu0 0.0
    %201 = vmatpush2.msra.mxu0 0.0
    %202 = vmatprep.subr.mxu0 0.0
    %203 = vmatpush2.msra.mxu0 0.0
    %204 = vmatprep.subr.mxu0 0.0
    %205 = vmatpush2.msra.mxu0 0.0
    %206 = vmatprep.subr.mxu0 0.0
    %207 = vmatpush2.msra.mxu0 0.0
    %208 = vmatprep.subr.mxu0 0.0
    %209 = vmatpush2.msra.mxu0 0.0
    %210 = vmatprep.subr.mxu0 0.0
    %211 = vmatpush2.msra.mxu0 0.0
    %212 = vmatprep.mubr.f32.mxu0 0.0
    %213 = vmatmul.mubr.f32.gmra.mxu0 %v131
    %v214 = vpop.f32.mrf.mxu0
    %v215 = vadd.f32 0.0, %v214
    %v216 = vpop.f32.mrf.mxu0
    %217 = vdwg.mxu0
    %218 = vst [vmem:[%s3] sm:$0xff] %v215
    // Predicated region
    $region26: #{forward.1} parent=1 // pred_check
      _
    $region27: #{forward.1} parent=1 // pred_check_branch
      %220 = sbr.rel (0) target = $region29
    $region28: #{forward.1} parent=1 // pred_region
      _
    $region29: #{forward.1} parent=1 // pred_fallthru
      _
    // Predicated region
    $region30: #{forward.1} parent=1 // pred_check
      _
    $region31: #{forward.1} parent=1 // pred_check_branch
      %222 = sbr.rel (0) target = $region33
    $region32: #{forward.1} parent=1 // pred_region
      _
    $region33: #{forward.1} parent=1 // pred_fallthru
      _
    %223 = vsyncpa [#allocation3], 1
    %224 = vsyncpa [#allocation5], 1

</llo_original>
